<compile_context>
chip_gen: v5e
topology: v5e:2x2
jax: 0.10.0
libtpu: 0.0.40
codegen_flags: <defaults>
</compile_context>

<pallas_src>
import functools

import jax
import jax.numpy as jnp
from jax.experimental import pallas as pl
from jax.experimental.pallas import tpu as pltpu


def _round_up(n, m):
    return ((n + m - 1) // m) * m


def dqn_kernel(x_ref, w1_ref, b1_ref, w2_ref, b2_ref, w3_ref, b3_ref, o_ref):
    """Fused MLP hot path: 3 MXU matmuls + f32 bias adds + VPU ReLUs, all in VMEM."""
    w_dtype = w1_ref.dtype
    x = x_ref[...].astype(w_dtype)

    h1 = jnp.dot(x, w1_ref[...], preferred_element_type=jnp.float32) + b1_ref[...]
    h1 = jnp.maximum(h1, 0.0)                      # f32 VPU (safe on v5e)

    h2 = jnp.dot(h1.astype(w_dtype), w2_ref[...],
                 preferred_element_type=jnp.float32) + b2_ref[...]
    h2 = jnp.maximum(h2, 0.0)

    out = jnp.dot(h2.astype(w_dtype), w3_ref[...],
                  preferred_element_type=jnp.float32) + b3_ref[...]
    o_ref[...] = out.astype(o_ref.dtype)


@functools.partial(jax.jit, static_argnames=("action_size", "block_b"))
def dqn_forward(x, params, action_size, block_b=None):
    """x: (B, state_size) f32. params: lane-dense padded params from pad_params."""
    w1, b1, w2, b2, w3, b3 = params
    B, S = x.shape
    Sp, Hp = w1.shape            # padded state / hidden dims (multiples of 128)
    Ap = w3.shape[1]             # padded action dim (multiple of 128)

    # Zero-pad the feature dim of x to match the padded W1 (zeros contribute 0).
    if S < Sp:
        x = jnp.pad(x, ((0, 0), (0, Sp - S)))

    # Batch tile: single grid step for small batches (kill per-step overhead),
    # 256-row tiles for large batches (near-full MXU M dimension, multi-step
    # parallel grid feeds both v7x TensorCores).
    if block_b is None:
        block_b = B if B <= 256 else 256
    grid = (pl.cdiv(B, block_b),)

    # VMEM guard: weights are replicated (and double-buffered by BlockSpec);
    # raise the scoped limit only when the resident set is large, capped at a
    # value that is still safe on v7x (64 MiB physical VMEM).
    w_bytes = (w1.size + w2.size + w3.size) * w1.dtype.itemsize
    b_bytes = (b1.size + b2.size + b3.size) * 4
    io_bytes = block_b * (Sp + Ap) * x.dtype.itemsize
    est = 2 * (w_bytes + b_bytes + io_bytes)
    vmem_limit = None
    if est > 16 * 1024 * 1024:
        vmem_limit = int(min(est * 3 // 2, 64 * 1024 * 1024))

    out = pl.pallas_call(
        dqn_kernel,
        out_shape=jax.ShapeDtypeStruct((B, Ap), jnp.float32),
        grid_spec=pltpu.PrefetchScalarGridSpec(
            num_scalar_prefetch=0,
            grid=grid,
            in_specs=[
                # x tiled along batch; weights/biases replicated (full blocks).
                pl.BlockSpec((block_b, Sp), lambda i: (i, 0)),
                pl.BlockSpec((Sp, Hp), lambda i: (0, 0)),
                pl.BlockSpec((1, Hp), lambda i: (0, 0)),
                pl.BlockSpec((Hp, Hp), lambda i: (0, 0)),
                pl.BlockSpec((1, Hp), lambda i: (0, 0)),
                pl.BlockSpec((Hp, Ap), lambda i: (0, 0)),
                pl.BlockSpec((1, Ap), lambda i: (0, 0)),
            ],
            # Lane-dense output (last dim = Ap, a multiple of 128) -> unmasked vst.
            out_specs=pl.BlockSpec((block_b, Ap), lambda i: (i, 0)),
        ),
        compiler_params=pltpu.CompilerParams(
            dimension_semantics=("parallel",),
            vmem_limit_bytes=vmem_limit,
        ),
    )(x, w1, b1, w2, b2, w3, b3)

    # Drop the zero-padded action columns outside the kernel.
    return out[:, :action_size]


def init_dqn_params(key, state_size, action_size, hidden_dim):
    """PyTorch nn.Linear-style init (uniform +/- 1/sqrt(fan_in)), unpadded."""
    ks = jax.random.split(key, 6)

    def linear(kw, kb, fan_in, fan_out):
        bound = 1.0 / jnp.sqrt(jnp.float32(fan_in))
        # Stored as (in, out): equivalent to PyTorch weight.T, so x @ W + b.
        w = jax.random.uniform(kw, (fan_in, fan_out), jnp.float32, -bound, bound)
        b = jax.random.uniform(kb, (1, fan_out), jnp.float32, -bound, bound)
        return w, b

    w1, b1 = linear(ks[0], ks[1], state_size, hidden_dim)
    w2, b2 = linear(ks[2], ks[3], hidden_dim, hidden_dim)
    w3, b3 = linear(ks[4], ks[5], hidden_dim, action_size)
    return (w1, b1, w2, b2, w3, b3)


def pad_params(params, weight_dtype=jnp.float32):
    """Zero-pad every feature dim up to a multiple of 128 (lane-dense storage).

    weight_dtype=jnp.bfloat16 halves weight DMA/VMEM on v6e/v7x (full-rate MXU);
    biases stay f32 so bias-add/ReLU run in f32 on the VPU (v5e-safe).
    """
    w1, b1, w2, b2, w3, b3 = params
    S, H = w1.shape
    A = w3.shape[1]
    Sp, Hp, Ap = _round_up(S, 128), _round_up(H, 128), _round_up(A, 128)

    def pad2(a, r, c):
        return jnp.pad(a, ((0, r - a.shape[0]), (0, c - a.shape[1])))

    return (
        pad2(w1, Sp, Hp).astype(weight_dtype),
        pad2(b1, 1, Hp).astype(jnp.float32),
        pad2(w2, Hp, Hp).astype(weight_dtype),
        pad2(b2, 1, Hp).astype(jnp.float32),
        pad2(w3, Hp, Ap).astype(weight_dtype),
        pad2(b3, 1, Ap).astype(jnp.float32),
    )


def dqn_reference(x, params):
    w1, b1, w2, b2, w3, b3 = params
    h1 = jnp.maximum(x @ w1 + b1, 0.0)
    h2 = jnp.maximum(h1 @ w2 + b2, 0.0)
    return h2 @ w3 + b3


if __name__ == "__main__":
    # Shapes consistent with the module: x is (batch, state_size).
    state_size = 16
    action_size = 4
    hidden_dim = 256  # nn.Module default

    key = jax.random.PRNGKey(0)
    k_params, k_x1, k_x2 = jax.random.split(key, 3)

    params = init_dqn_params(k_params, state_size, action_size, hidden_dim)
    padded = pad_params(params)  # f32, lane-dense (use bfloat16 on v6e/v7x)

    # Latency-bound case: batch=16 -> single grid step (block_b = batch).
    x_small = jax.random.normal(k_x1, (16, state_size), dtype=jnp.float32)
    out_small = jax.block_until_ready(dqn_forward(x_small, padded, action_size))
    ref_small = dqn_reference(x_small, params)
    assert out_small.shape == (16, action_size)
    assert jnp.allclose(out_small, ref_small, atol=1e-4, rtol=1e-5), "mismatch (small)"

    # Throughput case: batch=512 -> 2-step parallel grid of 256-row MXU tiles.
    x_big = jax.random.normal(k_x2, (512, state_size), dtype=jnp.float32)
    out_big = jax.block_until_ready(
        dqn_forward(x_big, padded, action_size, block_b=256))
    ref_big = dqn_reference(x_big, params)
    assert out_big.shape == (512, action_size)
    assert jnp.allclose(out_big, ref_big, atol=1e-4, rtol=1e-5), "mismatch (big)"

    print("KERNEL_OK")
</pallas_src>

<mosaic_0001>
module attributes {stable_mosaic.version = 11 : i64} {
  func.func @dqn_kernel(%arg0: i32, %arg1: memref<16x128xf32, #tpu.memory_space<vmem>>, %arg2: memref<128x256xf32, #tpu.memory_space<vmem>>, %arg3: memref<1x256xf32, #tpu.memory_space<vmem>>, %arg4: memref<256x256xf32, #tpu.memory_space<vmem>>, %arg5: memref<1x256xf32, #tpu.memory_space<vmem>>, %arg6: memref<256x128xf32, #tpu.memory_space<vmem>>, %arg7: memref<1x128xf32, #tpu.memory_space<vmem>>, %arg8: memref<16x128xf32, #tpu.memory_space<vmem>>) attributes {dimension_semantics = [#tpu.dimension_semantics<parallel>], iteration_bounds = array<i64: 1>, scalar_prefetch = 0 : i64, scratch_operands = 0 : i64, tpu.core_type = #tpu.core_type<tc>, window_params = [{transform_indices = @transform_0, window_bounds = array<i64: 16, 128>}, {pipeline_mode = #tpu.pipeline_mode<synchronous>, transform_indices = @transform_1, window_bounds = array<i64: 128, 256>}, {pipeline_mode = #tpu.pipeline_mode<synchronous>, transform_indices = @transform_2, window_bounds = array<i64: 1, 256>}, {pipeline_mode = #tpu.pipeline_mode<synchronous>, transform_indices = @transform_3, window_bounds = array<i64: 256, 256>}, {pipeline_mode = #tpu.pipeline_mode<synchronous>, transform_indices = @transform_4, window_bounds = array<i64: 1, 256>}, {pipeline_mode = #tpu.pipeline_mode<synchronous>, transform_indices = @transform_5, window_bounds = array<i64: 256, 128>}, {pipeline_mode = #tpu.pipeline_mode<synchronous>, transform_indices = @transform_6, window_bounds = array<i64: 1, 128>}, {transform_indices = @transform_7, window_bounds = array<i64: 16, 128>}]} {
    %c0 = arith.constant 0 : index
    %c0_0 = arith.constant 0 : index
    %0 = vector.load %arg1[%c0, %c0_0] : memref<16x128xf32, #tpu.memory_space<vmem>>, vector<16x128xf32>
    %c0_1 = arith.constant 0 : index
    %c0_2 = arith.constant 0 : index
    %1 = vector.load %arg2[%c0_1, %c0_2] : memref<128x256xf32, #tpu.memory_space<vmem>>, vector<128x256xf32>
    %cst = arith.constant dense<0.000000e+00> : vector<16x256xf32>
    %2 = tpu.matmul %0, %1, %cst {dimension_numbers = #tpu.dot_dimension_numbers<[1], [0], [0], [1], [0, 0, 1, 1], [], []>} : vector<16x128xf32>, vector<128x256xf32>, vector<16x256xf32> -> vector<16x256xf32>
    %c0_3 = arith.constant 0 : index
    %c0_4 = arith.constant 0 : index
    %3 = vector.load %arg3[%c0_3, %c0_4] : memref<1x256xf32, #tpu.memory_space<vmem>>, vector<1x256xf32>
    %4 = vector.broadcast %3 : vector<1x256xf32> to vector<16x256xf32>
    %5 = arith.addf %2, %4 : vector<16x256xf32>
    %cst_5 = arith.constant 0.000000e+00 : f32
    %6 = vector.broadcast %cst_5 : f32 to vector<16x256xf32>
    %7 = arith.maximumf %5, %6 : vector<16x256xf32>
    %c0_6 = arith.constant 0 : index
    %c0_7 = arith.constant 0 : index
    %8 = vector.load %arg4[%c0_6, %c0_7] : memref<256x256xf32, #tpu.memory_space<vmem>>, vector<256x256xf32>
    %cst_8 = arith.constant dense<0.000000e+00> : vector<16x256xf32>
    %9 = tpu.matmul %7, %8, %cst_8 {dimension_numbers = #tpu.dot_dimension_numbers<[1], [0], [0], [1], [0, 0, 1, 1], [], []>} : vector<16x256xf32>, vector<256x256xf32>, vector<16x256xf32> -> vector<16x256xf32>
    %c0_9 = arith.constant 0 : index
    %c0_10 = arith.constant 0 : index
    %10 = vector.load %arg5[%c0_9, %c0_10] : memref<1x256xf32, #tpu.memory_space<vmem>>, vector<1x256xf32>
    %11 = vector.broadcast %10 : vector<1x256xf32> to vector<16x256xf32>
    %12 = arith.addf %9, %11 : vector<16x256xf32>
    %cst_11 = arith.constant 0.000000e+00 : f32
    %13 = vector.broadcast %cst_11 : f32 to vector<16x256xf32>
    %14 = arith.maximumf %12, %13 : vector<16x256xf32>
    %c0_12 = arith.constant 0 : index
    %c0_13 = arith.constant 0 : index
    %15 = vector.load %arg6[%c0_12, %c0_13] : memref<256x128xf32, #tpu.memory_space<vmem>>, vector<256x128xf32>
    %cst_14 = arith.constant dense<0.000000e+00> : vector<16x128xf32>
    %16 = tpu.matmul %14, %15, %cst_14 {dimension_numbers = #tpu.dot_dimension_numbers<[1], [0], [0], [1], [0, 0, 1, 1], [], []>} : vector<16x256xf32>, vector<256x128xf32>, vector<16x128xf32> -> vector<16x128xf32>
    %c0_15 = arith.constant 0 : index
    %c0_16 = arith.constant 0 : index
    %17 = vector.load %arg7[%c0_15, %c0_16] : memref<1x128xf32, #tpu.memory_space<vmem>>, vector<1x128xf32>
    %18 = vector.broadcast %17 : vector<1x128xf32> to vector<16x128xf32>
    %19 = arith.addf %16, %18 : vector<16x128xf32>
    %c0_17 = arith.constant 0 : index
    %c0_18 = arith.constant 0 : index
    %20 = vector.load %arg8[%c0_17, %c0_18] : memref<16x128xf32, #tpu.memory_space<vmem>>, vector<16x128xf32>
    tpu.vector_store %arg8[%c0_17, %c0_18], %19 {strides = array<i32>} : memref<16x128xf32, #tpu.memory_space<vmem>>, vector<16x128xf32>,
    return
  }
  func.func @transform_0(%arg0: i32) -> (i32, i32) {
    %c0_i32 = arith.constant 0 : i32
    %c0_i32_0 = arith.constant 0 : i32
    return %arg0, %c0_i32 : i32, i32
  }
  func.func @transform_1(%arg0: i32) -> (i32, i32) {
    %c0_i32 = arith.constant 0 : i32
    %c0_i32_0 = arith.constant 0 : i32
    %c0_i32_1 = arith.constant 0 : i32
    return %c0_i32, %c0_i32_0 : i32, i32
  }
  func.func @transform_2(%arg0: i32) -> (i32, i32) {
    %c0_i32 = arith.constant 0 : i32
    %c0_i32_0 = arith.constant 0 : i32
    %c0_i32_1 = arith.constant 0 : i32
    return %c0_i32, %c0_i32_0 : i32, i32
  }
  func.func @transform_3(%arg0: i32) -> (i32, i32) {
    %c0_i32 = arith.constant 0 : i32
    %c0_i32_0 = arith.constant 0 : i32
    %c0_i32_1 = arith.constant 0 : i32
    return %c0_i32, %c0_i32_0 : i32, i32
  }
  func.func @transform_4(%arg0: i32) -> (i32, i32) {
    %c0_i32 = arith.constant 0 : i32
    %c0_i32_0 = arith.constant 0 : i32
    %c0_i32_1 = arith.constant 0 : i32
    return %c0_i32, %c0_i32_0 : i32, i32
  }
  func.func @transform_5(%arg0: i32) -> (i32, i32) {
    %c0_i32 = arith.constant 0 : i32
    %c0_i32_0 = arith.constant 0 : i32
    %c0_i32_1 = arith.constant 0 : i32
    return %c0_i32, %c0_i32_0 : i32, i32
  }
  func.func @transform_6(%arg0: i32) -> (i32, i32) {
    %c0_i32 = arith.constant 0 : i32
    %c0_i32_0 = arith.constant 0 : i32
    %c0_i32_1 = arith.constant 0 : i32
    return %c0_i32, %c0_i32_0 : i32, i32
  }
  func.func @transform_7(%arg0: i32) -> (i32, i32) {
    %c0_i32 = arith.constant 0 : i32
    %c0_i32_0 = arith.constant 0 : i32
    return %arg0, %c0_i32 : i32, i32
  }
}

</mosaic_0001>

<llo_original>
// kernel: dqn_forward.1
$region0: #{dqn_forward.1}
  #allocation0 [shape = 'u32[]', space=smem, size = 0x4, offset = 0x4, fixed_abs, tag = 'smem constant byte address 0x4 - core index']
  #allocation1 [shape = 'u32[72,128]{1,0:T(1,128)}', space=vmem, size = 0x9000, scoped, tag = 'internal scratch']
  %s0 = inlined_call_operand.vmem [shape: f32[16,128], index: 0, kind: input, shape index: {}]
  %s1 = inlined_call_operand.hbm [shape: f32[128,256], index: 1, kind: input, shape index: {}]
  %s2 = inlined_call_operand.vmem [shape: f32[1,256], index: 2, kind: input, shape index: {}]
  %s3 = inlined_call_operand.hbm [shape: f32[256,256], index: 3, kind: input, shape index: {}]
  %s4 = inlined_call_operand.vmem [shape: f32[1,256], index: 4, kind: input, shape index: {}]
  %s5 = inlined_call_operand.hbm [shape: f32[256,128], index: 5, kind: input, shape index: {}]
  %s6 = inlined_call_operand.vmem [shape: f32[1,128], index: 6, kind: input, shape index: {}]
  %s7 = inlined_call_operand.vmem [shape: f32[16,128], index: 7, kind: output, shape index: {}]
  %s8 = sld [smem:[#allocation0]]
  $region50: #{dqn_forward.1} parent=0
    _
  %s10 = ssub.s32 1, %s8
  %s11 = scalar_select 0, %s10, %s8
  $region1: #{dqn_forward.1} parent=0
    #allocation2 [shape = 'u8[131072]{0}', space=vmem, size = 0x20000, scoped, tag = 'input window, operand 1, single buffered']
    #allocation3 [shape = 's32[1]{0}', space=sflag, size = 0x4, scoped, tag = 'scoped memory for dqn_forward.1']
    #allocation4 [shape = 'u8[262144]{0}', space=vmem, size = 0x40000, scoped, tag = 'input window, operand 3, single buffered']
    #allocation5 [shape = 's32[1]{0}', space=sflag, size = 0x4, scoped, tag = 'scoped memory for dqn_forward.1']
    #allocation6 [shape = 'u8[131072]{0}', space=vmem, size = 0x20000, scoped, tag = 'input window, operand 5, single buffered']
    %12 = vsyncpa [#allocation3], 0
    %13 = vsyncpa [#allocation5], 0
    // Predicated region
    $region2: #{dqn_forward.1} parent=1 // pred_check
      _
    $region3: #{dqn_forward.1} parent=1 // pred_check_branch
      %15 = sbr.rel (0) target = $region5
    $region4: #{dqn_forward.1} parent=1 // pred_region
      _
    $region5: #{dqn_forward.1} parent=1 // pred_fallthru
      _
    // Predicated region
    $region6: #{dqn_forward.1} parent=1 // pred_check
      _
    $region7: #{dqn_forward.1} parent=1 // pred_check_branch
      %17 = sbr.rel (0) target = $region9
    $region8: #{dqn_forward.1} parent=1 // pred_region
      %19 = vsyncadd [#allocation3], 0
      %s20 = sshll.u32 %s1, 4
      %s21 = int_to_ptr.hbm [resolvable:$true] %s20
      %s22 = sshll.u32 [#allocation2], 4
      %s23 = int_to_ptr.vmem [resolvable:$true] %s22
      %28 = dma.hbm_to_vmem [thread:$0]  %s21, 4096, %s23, [#allocation3], 256, 256, 16
    $region9: #{dqn_forward.1} parent=1 // pred_fallthru
      _
    // Predicated region
    $region10: #{dqn_forward.1} parent=1 // pred_check
      _
    $region11: #{dqn_forward.1} parent=1 // pred_check_branch
      %30 = sbr.rel (0) target = $region13
    $region12: #{dqn_forward.1} parent=1 // pred_region
      _
    $region13: #{dqn_forward.1} parent=1 // pred_fallthru
      _
    // Predicated region
    $region14: #{dqn_forward.1} parent=1 // pred_check
      _
    $region15: #{dqn_forward.1} parent=1 // pred_check_branch
      %32 = sbr.rel (0) target = $region17
    $region16: #{dqn_forward.1} parent=1 // pred_region
      %34 = vsyncadd [#allocation5], 0
      %s35 = sshll.u32 %s3, 4
      %s36 = int_to_ptr.hbm [resolvable:$true] %s35
      %s37 = sshll.u32 [#allocation4], 4
      %s38 = int_to_ptr.vmem [resolvable:$true] %s37
      %43 = dma.hbm_to_vmem [thread:$0]  %s36, 8192, %s38, [#allocation5], 256, 256, 16
    $region17: #{dqn_forward.1} parent=1 // pred_fallthru
      _
    // Predicated region
    $region18: #{dqn_forward.1} parent=1 // pred_check
      _
    $region19: #{dqn_forward.1} parent=1 // pred_check_branch
      %45 = sbr.rel (0) target = $region21
    $region20: #{dqn_forward.1} parent=1 // pred_region
      _
    $region21: #{dqn_forward.1} parent=1 // pred_fallthru
      _
    // Predicated region
    $region22: #{dqn_forward.1} parent=1 // pred_check
      _
    $region23: #{dqn_forward.1} parent=1 // pred_check_branch
      %47 = sbr.rel (0) target = $region25
    $region24: #{dqn_forward.1} parent=1 // pred_region
      %49 = vsyncadd [#allocation5], 0
      %s50 = sshll.u32 %s5, 4
      %s51 = int_to_ptr.hbm [resolvable:$true] %s50
      %s52 = sshll.u32 [#allocation6], 4
      %s53 = int_to_ptr.vmem [resolvable:$true] %s52
      %58 = dma.hbm_to_vmem [thread:$0]  %s51, 4096, %s53, [#allocation5], 128, 128, 8
    $region25: #{dqn_forward.1} parent=1 // pred_fallthru
      _
    // Predicated region
    $region26: #{dqn_forward.1} parent=1 // pred_check
      _
    $region27: #{dqn_forward.1} parent=1 // pred_check_branch
      %60 = sbr.rel (0) target = $region29
    $region28: #{dqn_forward.1} parent=1 // pred_region
      _
    $region29: #{dqn_forward.1} parent=1 // pred_fallthru
      _
    // Predicated region
    $region30: #{dqn_forward.1} parent=1 // pred_check
      _
    $region31: #{dqn_forward.1} parent=1 // pred_check_branch
      %62 = sbr.rel (0) target = $region33
    $region32: #{dqn_forward.1} parent=1 // pred_region
      %64 = dma.done [#allocation3], 4096
    $region33: #{dqn_forward.1} parent=1 // pred_fallthru
      _
    // Predicated region
    $region34: #{dqn_forward.1} parent=1 // pred_check
      _
    $region35: #{dqn_forward.1} parent=1 // pred_check_branch
      %66 = sbr.rel (0) target = $region37
    $region36: #{dqn_forward.1} parent=1 // pred_region
      %68 = dma.done [#allocation5], 8192
    $region37: #{dqn_forward.1} parent=1 // pred_fallthru
      _
    // Predicated region
    $region38: #{dqn_forward.1} parent=1 // pred_check
      _
    $region39: #{dqn_forward.1} parent=1 // pred_check_branch
      %70 = sbr.rel (0) target = $region41
    $region40: #{dqn_forward.1} parent=1 // pred_region
      %72 = dma.done [#allocation5], 4096
    $region41: #{dqn_forward.1} parent=1 // pred_fallthru
      _
    %v73 = vld [vmem:[%s0] sm:$0xff]
    %v74 = vld [vmem:[%s0 + $0x8] sm:$0xff]
    %v75 = vld [vmem:[#allocation2] sm:$0xff]
    %v76 = vld [vmem:[#allocation2 + $0x8] sm:$0xff]
    %v77 = vld [vmem:[#allocation2 + $0x10] sm:$0xff]
    %v78 = vld [vmem:[#allocation2 + $0x18] sm:$0xff]
    %v79 = vld [vmem:[#allocation2 + $0x20] sm:$0xff]
    %v80 = vld [vmem:[#allocation2 + $0x28] sm:$0xff]
    %v81 = vld [vmem:[#allocation2 + $0x30] sm:$0xff]
    %v82 = vld [vmem:[#allocation2 + $0x38] sm:$0xff]
    %v83 = vld [vmem:[#allocation2 + $0x40] sm:$0xff]
    %v84 = vld [vmem:[#allocation2 + $0x48] sm:$0xff]
    %v85 = vld [vmem:[#allocation2 + $0x50] sm:$0xff]
    %v86 = vld [vmem:[#allocation2 + $0x58] sm:$0xff]
    %v87 = vld [vmem:[#allocation2 + $0x60] sm:$0xff]
    %v88 = vld [vmem:[#allocation2 + $0x68] sm:$0xff]
    %v89 = vld [vmem:[#allocation2 + $0x70] sm:$0xff]
    %v90 = vld [vmem:[#allocation2 + $0x78] sm:$0xff]
    %v91 = vld [vmem:[#allocation2 + $0x80] sm:$0xff]
    %v92 = vld [vmem:[#allocation2 + $0x88] sm:$0xff]
    %v93 = vld [vmem:[#allocation2 + $0x90] sm:$0xff]
    %v94 = vld [vmem:[#allocation2 + $0x98] sm:$0xff]
    %v95 = vld [vmem:[#allocation2 + $0xa0] sm:$0xff]
    %v96 = vld [vmem:[#allocation2 + $0xa8] sm:$0xff]
    %v97 = vld [vmem:[#allocation2 + $0xb0] sm:$0xff]
    %v98 = vld [vmem:[#allocation2 + $0xb8] sm:$0xff]
    %v99 = vld [vmem:[#allocation2 + $0xc0] sm:$0xff]
    %v100 = vld [vmem:[#allocation2 + $0xc8] sm:$0xff]
    %v101 = vld [vmem:[#allocation2 + $0xd0] sm:$0xff]
    %v102 = vld [vmem:[#allocation2 + $0xd8] sm:$0xff]
    %v103 = vld [vmem:[#allocation2 + $0xe0] sm:$0xff]
    %v104 = vld [vmem:[#allocation2 + $0xe8] sm:$0xff]
    %v105 = vld [vmem:[#allocation2 + $0xf0] sm:$0xff]
    %v106 = vld [vmem:[#allocation2 + $0xf8] sm:$0xff]
    %v107 = vld [vmem:[%s2] sm:$0x3]
    %v109 = vperm.slane %v107, 0
    %v110 = vperm.slane %v107, 1
    %113 = vmatpush.msra.mxu0 %v105
    %114 = vmatpush.msra.mxu0 %v103
    %115 = vmatpush.msra.mxu0 %v101
    %116 = vmatpush.msra.mxu0 %v99
    %117 = vmatpush.msra.mxu0 %v97
    %118 = vmatpush.msra.mxu0 %v95
    %119 = vmatpush.msra.mxu0 %v93
    %120 = vmatpush.msra.mxu0 %v91
    %121 = vmatpush.msra.mxu0 %v89
    %122 = vmatpush.msra.mxu0 %v87
    %123 = vmatpush.msra.mxu0 %v85
    %124 = vmatpush.msra.mxu0 %v83
    %125 = vmatpush.msra.mxu0 %v81
    %126 = vmatpush.msra.mxu0 %v79
    %127 = vmatpush.msra.mxu0 %v77
    %128 = vmatpush.msra.mxu0 %v75
    %129 = vmatmul.f32.gmra.mxu0 %v73
    %v130 = vpop.f32.mrf.mxu0
    %v131 = vadd.f32 %v109, %v130
    %132 = vmatmul.f32.gmra.mxu0 %v74
    %v133 = vpop.f32.mrf.mxu0
    %v134 = vadd.f32 %v109, %v133
    %135 = vdwg.mxu0
    %136 = vmatpush.msra.mxu0 %v106
    %137 = vmatpush.msra.mxu0 %v104
    %138 = vmatpush.msra.mxu0 %v102
    %139 = vmatpush.msra.mxu0 %v100
    %140 = vmatpush.msra.mxu0 %v98
    %141 = vmatpush.msra.mxu0 %v96
    %142 = vmatpush.msra.mxu0 %v94
    %143 = vmatpush.msra.mxu0 %v92
    %144 = vmatpush.msra.mxu0 %v90
    %145 = vmatpush.msra.mxu0 %v88
    %146 = vmatpush.msra.mxu0 %v86
    %147 = vmatpush.msra.mxu0 %v84
    %148 = vmatpush.msra.mxu0 %v82
    %149 = vmatpush.msra.mxu0 %v80
    %150 = vmatpush.msra.mxu0 %v78
    %151 = vmatpush.msra.mxu0 %v76
    %152 = vmatmul.f32.gmra.mxu0 %v73
    %v153 = vpop.f32.mrf.mxu0
    %v154 = vadd.f32 %v110, %v153
    %155 = vmatmul.f32.gmra.mxu0 %v74
    %v156 = vpop.f32.mrf.mxu0
    %v157 = vadd.f32 %v110, %v156
    %158 = vdwg.mxu0
    %v159 = vmax.f32 %v131, 0.0
    %v160 = vmax.f32 %v154, 0.0
    %v161 = vmax.f32 %v134, 0.0
    %v162 = vmax.f32 %v157, 0.0
    %v163 = vld [vmem:[#allocation4] sm:$0xff]
    %v164 = vld [vmem:[#allocation4 + $0x8] sm:$0xff]
    %v165 = vld [vmem:[#allocation4 + $0x10] sm:$0xff]
    %v166 = vld [vmem:[#allocation4 + $0x18] sm:$0xff]
    %v167 = vld [vmem:[#allocation4 + $0x20] sm:$0xff]
    %v168 = vld [vmem:[#allocation4 + $0x28] sm:$0xff]
    %v169 = vld [vmem:[#allocation4 + $0x30] sm:$0xff]
    %v170 = vld [vmem:[#allocation4 + $0x38] sm:$0xff]
    %v171 = vld [vmem:[#allocation4 + $0x40] sm:$0xff]
    %v172 = vld [vmem:[#allocation4 + $0x48] sm:$0xff]
    %v173 = vld [vmem:[#allocation4 + $0x50] sm:$0xff]
    %v174 = vld [vmem:[#allocation4 + $0x58] sm:$0xff]
    %v175 = vld [vmem:[#allocation4 + $0x60] sm:$0xff]
    %v176 = vld [vmem:[#allocation4 + $0x68] sm:$0xff]
    %v177 = vld [vmem:[#allocation4 + $0x70] sm:$0xff]
    %v178 = vld [vmem:[#allocation4 + $0x78] sm:$0xff]
    %v179 = vld [vmem:[#allocation4 + $0x80] sm:$0xff]
    %v180 = vld [vmem:[#allocation4 + $0x88] sm:$0xff]
    %v181 = vld [vmem:[#allocation4 + $0x90] sm:$0xff]
    %v182 = vld [vmem:[#allocation4 + $0x98] sm:$0xff]
    %v183 = vld [vmem:[#allocation4 + $0xa0] sm:$0xff]
    %v184 = vld [vmem:[#allocation4 + $0xa8] sm:$0xff]
    %v185 = vld [vmem:[#allocation4 + $0xb0] sm:$0xff]
    %v186 = vld [vmem:[#allocation4 + $0xb8] sm:$0xff]
    %v187 = vld [vmem:[#allocation4 + $0xc0] sm:$0xff]
    %v188 = vld [vmem:[#allocation4 + $0xc8] sm:$0xff]
    %v189 = vld [vmem:[#allocation4 + $0xd0] sm:$0xff]
    %v190 = vld [vmem:[#allocation4 + $0xd8] sm:$0xff]
    %v191 = vld [vmem:[#allocation4 + $0xe0] sm:$0xff]
    %v192 = vld [vmem:[#allocation4 + $0xe8] sm:$0xff]
    %v193 = vld [vmem:[#allocation4 + $0xf0] sm:$0xff]
    %v194 = vld [vmem:[#allocation4 + $0xf8] sm:$0xff]
    %v195 = vld [vmem:[#allocation4 + $0x100] sm:$0xff]
    %v196 = vld [vmem:[#allocation4 + $0x108] sm:$0xff]
    %v197 = vld [vmem:[#allocation4 + $0x110] sm:$0xff]
    %v198 = vld [vmem:[#allocation4 + $0x118] sm:$0xff]
    %v199 = vld [vmem:[#allocation4 + $0x120] sm:$0xff]
    %v200 = vld [vmem:[#allocation4 + $0x128] sm:$0xff]
    %v201 = vld [vmem:[#allocation4 + $0x130] sm:$0xff]
    %v202 = vld [vmem:[#allocation4 + $0x138] sm:$0xff]
    %v203 = vld [vmem:[#allocation4 + $0x140] sm:$0xff]
    %v204 = vld [vmem:[#allocation4 + $0x148] sm:$0xff]
    %v205 = vld [vmem:[#allocation4 + $0x150] sm:$0xff]
    %v206 = vld [vmem:[#allocation4 + $0x158] sm:$0xff]
    %v207 = vld [vmem:[#allocation4 + $0x160] sm:$0xff]
    %v208 = vld [vmem:[#allocation4 + $0x168] sm:$0xff]
    %v209 = vld [vmem:[#allocation4 + $0x170] sm:$0xff]
    %v210 = vld [vmem:[#allocation4 + $0x178] sm:$0xff]
    %v211 = vld [vmem:[#allocation4 + $0x180] sm:$0xff]
    %v212 = vld [vmem:[#allocation4 + $0x188] sm:$0xff]
    %v213 = vld [vmem:[#allocation4 + $0x190] sm:$0xff]
    %v214 = vld [vmem:[#allocation4 + $0x198] sm:$0xff]
    %v215 = vld [vmem:[#allocation4 + $0x1a0] sm:$0xff]
    %v216 = vld [vmem:[#allocation4 + $0x1a8] sm:$0xff]
    %v217 = vld [vmem:[#allocation4 + $0x1b0] sm:$0xff]
    %v218 = vld [vmem:[#allocation4 + $0x1b8] sm:$0xff]
    %v219 = vld [vmem:[#allocation4 + $0x1c0] sm:$0xff]
    %v220 = vld [vmem:[#allocation4 + $0x1c8] sm:$0xff]
    %v221 = vld [vmem:[#allocation4 + $0x1d0] sm:$0xff]
    %v222 = vld [vmem:[#allocation4 + $0x1d8] sm:$0xff]
    %v223 = vld [vmem:[#allocation4 + $0x1e0] sm:$0xff]
    %v224 = vld [vmem:[#allocation4 + $0x1e8] sm:$0xff]
    %v225 = vld [vmem:[#allocation4 + $0x1f0] sm:$0xff]
    %v226 = vld [vmem:[#allocation4 + $0x1f8] sm:$0xff]
    %v227 = vld [vmem:[%s4] sm:$0x3]
    %v229 = vperm.slane %v227, 0
    %v230 = vperm.slane %v227, 1
    %233 = vmatpush.msra.mxu0 %v193
    %234 = vmatpush.msra.mxu0 %v191
    %235 = vmatpush.msra.mxu0 %v189
    %236 = vmatpush.msra.mxu0 %v187
    %237 = vmatpush.msra.mxu0 %v185
    %238 = vmatpush.msra.mxu0 %v183
    %239 = vmatpush.msra.mxu0 %v181
    %240 = vmatpush.msra.mxu0 %v179
    %241 = vmatpush.msra.mxu0 %v177
    %242 = vmatpush.msra.mxu0 %v175
    %243 = vmatpush.msra.mxu0 %v173
    %244 = vmatpush.msra.mxu0 %v171
    %245 = vmatpush.msra.mxu0 %v169
    %246 = vmatpush.msra.mxu0 %v167
    %247 = vmatpush.msra.mxu0 %v165
    %248 = vmatpush.msra.mxu0 %v163
    %249 = vmatmul.f32.gmra.mxu0 %v159
    %v250 = vpop.f32.mrf.mxu0
    %v251 = vadd.f32 %v229, %v250
    %252 = vmatmul.f32.gmra.mxu0 %v161
    %v253 = vpop.f32.mrf.mxu0
    %v254 = vadd.f32 %v229, %v253
    %255 = vdwg.mxu0
    %256 = vmatpush.msra.mxu0 %v225
    %257 = vmatpush.msra.mxu0 %v223
    %258 = vmatpush.msra.mxu0 %v221
    %259 = vmatpush.msra.mxu0 %v219
    %260 = vmatpush.msra.mxu0 %v217
    %261 = vmatpush.msra.mxu0 %v215
    %262 = vmatpush.msra.mxu0 %v213
    %263 = vmatpush.msra.mxu0 %v211
    %264 = vmatpush.msra.mxu0 %v209
    %265 = vmatpush.msra.mxu0 %v207
    %266 = vmatpush.msra.mxu0 %v205
    %267 = vmatpush.msra.mxu0 %v203
    %268 = vmatpush.msra.mxu0 %v201
    %269 = vmatpush.msra.mxu0 %v199
    %270 = vmatpush.msra.mxu0 %v197
    %271 = vmatpush.msra.mxu0 %v195
    %272 = vmatmul.f32.gmra.mxu0 %v160
    %v273 = vpop.f32.mrf.mxu0
    %v274 = vadd.f32 %v251, %v273
    %275 = vmatmul.f32.gmra.mxu0 %v162
    %v276 = vpop.f32.mrf.mxu0
    %v277 = vadd.f32 %v254, %v276
    %278 = vdwg.mxu0
    %279 = vmatpush.msra.mxu0 %v194
    %280 = vmatpush.msra.mxu0 %v192
    %281 = vmatpush.msra.mxu0 %v190
    %282 = vmatpush.msra.mxu0 %v188
    %283 = vmatpush.msra.mxu0 %v186
    %284 = vmatpush.msra.mxu0 %v184
    %285 = vmatpush.msra.mxu0 %v182
    %286 = vmatpush.msra.mxu0 %v180
    %287 = vmatpush.msra.mxu0 %v178
    %288 = vmatpush.msra.mxu0 %v176
    %289 = vmatpush.msra.mxu0 %v174
    %290 = vmatpush.msra.mxu0 %v172
    %291 = vmatpush.msra.mxu0 %v170
    %292 = vmatpush.msra.mxu0 %v168
    %293 = vmatpush.msra.mxu0 %v166
    %294 = vmatpush.msra.mxu0 %v164
    %295 = vmatmul.f32.gmra.mxu0 %v159
    %v296 = vpop.f32.mrf.mxu0
    %v297 = vadd.f32 %v230, %v296
    %298 = vmatmul.f32.gmra.mxu0 %v161
    %v299 = vpop.f32.mrf.mxu0
    %v300 = vadd.f32 %v230, %v299
    %301 = vdwg.mxu0
    %302 = vmatpush.msra.mxu0 %v226
    %303 = vmatpush.msra.mxu0 %v224
    %304 = vmatpush.msra.mxu0 %v222
    %305 = vmatpush.msra.mxu0 %v220
    %306 = vmatpush.msra.mxu0 %v218
    %307 = vmatpush.msra.mxu0 %v216
    %308 = vmatpush.msra.mxu0 %v214
    %309 = vmatpush.msra.mxu0 %v212
    %310 = vmatpush.msra.mxu0 %v210
    %311 = vmatpush.msra.mxu0 %v208
    %312 = vmatpush.msra.mxu0 %v206
    %313 = vmatpush.msra.mxu0 %v204
    %314 = vmatpush.msra.mxu0 %v202
    %315 = vmatpush.msra.mxu0 %v200
    %316 = vmatpush.msra.mxu0 %v198
    %317 = vmatpush.msra.mxu0 %v196
    %318 = vmatmul.f32.gmra.mxu0 %v160
    %v319 = vpop.f32.mrf.mxu0
    %v320 = vadd.f32 %v297, %v319
    %321 = vmatmul.f32.gmra.mxu0 %v162
    %v322 = vpop.f32.mrf.mxu0
    %v323 = vadd.f32 %v300, %v322
    %324 = vdwg.mxu0
    %v325 = vmax.f32 %v274, 0.0
    %v326 = vmax.f32 %v320, 0.0
    %v327 = vmax.f32 %v277, 0.0
    %v328 = vmax.f32 %v323, 0.0
    %v329 = vld [vmem:[#allocation6] sm:$0xff]
    %v330 = vld [vmem:[#allocation6 + $0x8] sm:$0xff]
    %v331 = vld [vmem:[#allocation6 + $0x10] sm:$0xff]
    %v332 = vld [vmem:[#allocation6 + $0x18] sm:$0xff]
    %v333 = vld [vmem:[#allocation6 + $0x20] sm:$0xff]
    %v334 = vld [vmem:[#allocation6 + $0x28] sm:$0xff]
    %v335 = vld [vmem:[#allocation6 + $0x30] sm:$0xff]
    %v336 = vld [vmem:[#allocation6 + $0x38] sm:$0xff]
    %v337 = vld [vmem:[#allocation6 + $0x40] sm:$0xff]
    %v338 = vld [vmem:[#allocation6 + $0x48] sm:$0xff]
    %v339 = vld [vmem:[#allocation6 + $0x50] sm:$0xff]
    %v340 = vld [vmem:[#allocation6 + $0x58] sm:$0xff]
    %v341 = vld [vmem:[#allocation6 + $0x60] sm:$0xff]
    %v342 = vld [vmem:[#allocation6 + $0x68] sm:$0xff]
    %v343 = vld [vmem:[#allocation6 + $0x70] sm:$0xff]
    %v344 = vld [vmem:[#allocation6 + $0x78] sm:$0xff]
    %v345 = vld [vmem:[#allocation6 + $0x80] sm:$0xff]
    %v346 = vld [vmem:[#allocation6 + $0x88] sm:$0xff]
    %v347 = vld [vmem:[#allocation6 + $0x90] sm:$0xff]
    %v348 = vld [vmem:[#allocation6 + $0x98] sm:$0xff]
    %v349 = vld [vmem:[#allocation6 + $0xa0] sm:$0xff]
    %v350 = vld [vmem:[#allocation6 + $0xa8] sm:$0xff]
    %v351 = vld [vmem:[#allocation6 + $0xb0] sm:$0xff]
    %v352 = vld [vmem:[#allocation6 + $0xb8] sm:$0xff]
    %v353 = vld [vmem:[#allocation6 + $0xc0] sm:$0xff]
    %v354 = vld [vmem:[#allocation6 + $0xc8] sm:$0xff]
    %v355 = vld [vmem:[#allocation6 + $0xd0] sm:$0xff]
    %v356 = vld [vmem:[#allocation6 + $0xd8] sm:$0xff]
    %v357 = vld [vmem:[#allocation6 + $0xe0] sm:$0xff]
    %v358 = vld [vmem:[#allocation6 + $0xe8] sm:$0xff]
    %v359 = vld [vmem:[#allocation6 + $0xf0] sm:$0xff]
    %v360 = vld [vmem:[#allocation6 + $0xf8] sm:$0xff]
    %v361 = vld [vmem:[%s6] sm:$0x1]
    %v363 = vperm.slane %v361, 0
    %365 = vmatpush.msra.mxu0 %v344
    %366 = vmatpush.msra.mxu0 %v343
    %367 = vmatpush.msra.mxu0 %v342
    %368 = vmatpush.msra.mxu0 %v341
    %369 = vmatpush.msra.mxu0 %v340
    %370 = vmatpush.msra.mxu0 %v339
    %371 = vmatpush.msra.mxu0 %v338
    %372 = vmatpush.msra.mxu0 %v337
    %373 = vmatpush.msra.mxu0 %v336
    %374 = vmatpush.msra.mxu0 %v335
    %375 = vmatpush.msra.mxu0 %v334
    %376 = vmatpush.msra.mxu0 %v333
    %377 = vmatpush.msra.mxu0 %v332
    %378 = vmatpush.msra.mxu0 %v331
    %379 = vmatpush.msra.mxu0 %v330
    %380 = vmatpush.msra.mxu0 %v329
    %381 = vmatmul.f32.gmra.mxu0 %v325
    %v382 = vpop.f32.mrf.mxu0
    %v383 = vadd.f32 %v363, %v382
    %384 = vmatmul.f32.gmra.mxu0 %v327
    %v385 = vpop.f32.mrf.mxu0
    %v386 = vadd.f32 %v363, %v385
    %387 = vdwg.mxu0
    %388 = vmatpush.msra.mxu0 %v360
    %389 = vmatpush.msra.mxu0 %v359
    %390 = vmatpush.msra.mxu0 %v358
    %391 = vmatpush.msra.mxu0 %v357
    %392 = vmatpush.msra.mxu0 %v356
    %393 = vmatpush.msra.mxu0 %v355
    %394 = vmatpush.msra.mxu0 %v354
    %395 = vmatpush.msra.mxu0 %v353
    %396 = vmatpush.msra.mxu0 %v352
    %397 = vmatpush.msra.mxu0 %v351
    %398 = vmatpush.msra.mxu0 %v350
    %399 = vmatpush.msra.mxu0 %v349
    %400 = vmatpush.msra.mxu0 %v348
    %401 = vmatpush.msra.mxu0 %v347
    %402 = vmatpush.msra.mxu0 %v346
    %403 = vmatpush.msra.mxu0 %v345
    %404 = vmatmul.f32.gmra.mxu0 %v326
    %v405 = vpop.f32.mrf.mxu0
    %v406 = vadd.f32 %v383, %v405
    %407 = vmatmul.f32.gmra.mxu0 %v328
    %v408 = vpop.f32.mrf.mxu0
    %v409 = vadd.f32 %v386, %v408
    %410 = vdwg.mxu0
    %411 = vst [vmem:[%s7] sm:$0xff] %v406
    %412 = vst [vmem:[%s7 + $0x8] sm:$0xff] %v409
    // Predicated region
    $region42: #{dqn_forward.1} parent=1 // pred_check
      _
    $region43: #{dqn_forward.1} parent=1 // pred_check_branch
      %414 = sbr.rel (0) target = $region45
    $region44: #{dqn_forward.1} parent=1 // pred_region
      _
    $region45: #{dqn_forward.1} parent=1 // pred_fallthru
      _
    // Predicated region
    $region46: #{dqn_forward.1} parent=1 // pred_check
      _
    $region47: #{dqn_forward.1} parent=1 // pred_check_branch
      %416 = sbr.rel (0) target = $region49
    $region48: #{dqn_forward.1} parent=1 // pred_region
      _
    $region49: #{dqn_forward.1} parent=1 // pred_fallthru
      _
    %417 = vsyncpa [#allocation3], 1
    %418 = vsyncpa [#allocation5], 1

</llo_original>
